<compile_context>
chip_gen: v5e
topology: v5e:2x2
jax: 0.10.0
libtpu: 0.0.40
codegen_flags: <defaults>
</compile_context>

<pallas_src>
import math
from functools import partial

import jax
import jax.numpy as jnp
from jax.experimental import pallas as pl
from jax.experimental.pallas import tpu as pltpu


def _vmem_limit_bytes():
    """Per-generation scoped-VMEM budget (leave ~25% headroom for the compiler).

    v5e/v6e: 128 MiB physical -> ~96 MiB; v7x: 64 MiB physical -> ~48 MiB.
    Falls back to a conservative 48 MiB if the query is unavailable.
    """
    cap = 64 * 1024 * 1024
    try:
        cap = int(getattr(pltpu.get_tpu_info(), "vmem_capacity_bytes", cap))
    except Exception:
        pass
    return max(32 * 1024 * 1024, min(3 * cap // 4, 112 * 1024 * 1024))


VMEM_LIMIT = _vmem_limit_bytes()
KEY_RESIDENT_BYTES = 8 * 1024 * 1024   # budget for keeping both key matrices VMEM-resident


# ------------------------------ tiling helpers --------------------------------
# TODO(synk): for N not divisible by 128/8 these helpers fall back to the full dim;
# large non-divisible N should instead be padded (with in-kernel masking of the
# padded keys/anchors) so blocks never exceed the scoped-VMEM budget.

def _lane_tile(n, pref):
    """Tile that may land on a lane axis: multiple of 128 dividing n, else n."""
    t = pref
    while t >= 128:
        if n % t == 0:
            return t
        t -= 128
    return n


def _sub_tile(n, pref):
    """Tile that only lands on a sublane axis: multiple of 8 dividing n, else n."""
    t = min(pref, n)
    while t >= 8:
        if n % t == 0:
            return t
        t -= 8
    return n


# ----------------------------- Pallas kernels ----------------------------------

def xw_kernel(x_ref, w_ref, dis_ref, o_ref):
    # xw_scaled = D^{-1/2} * (x @ W_g)   (bf16 output; f32 MXU accumulation).
    xw = jnp.dot(x_ref[0], w_ref[...], preferred_element_type=jnp.float32)
    o_ref[0] = (xw * dis_ref[0]).astype(jnp.bfloat16)


def gcn_mm_kernel(a_ref, xw_ref, dis_ref, b_ref, o_ref, acc_ref):
    # z = relu( D^{-1/2} * ((A+I) @ xw_scaled) + b ),  (A+I) streamed in (row, k) tiles.
    k = pl.program_id(2)

    @pl.when(k == 0)
    def _():
        acc_ref[...] = jnp.zeros_like(acc_ref)

    acc_ref[...] += jnp.dot(a_ref[0], xw_ref[0], preferred_element_type=jnp.float32)

    @pl.when(k == pl.num_programs(2) - 1)
    def _():
        z = jnp.maximum(acc_ref[...] * dis_ref[0] + b_ref[...], 0.0)
        o_ref[0] = z.astype(o_ref.dtype)


def proj_norm_kernel(z_ref, w1_ref, b1_ref, w2_ref, b2_ref, g_ref, *, scale):
    # h = ELU(z @ W1 + b1); o = h @ W2 + b2; g = sqrt(1/tau) * o / max(||o||, 1e-12)
    # (bf16 output -> MXU operand of the loss kernel; g.g == sim/tau).
    z = z_ref[0]
    h = jnp.dot(z, w1_ref[...], preferred_element_type=jnp.float32) + b1_ref[...]
    h = jnp.where(h > 0.0, h, jnp.exp(jnp.minimum(h, 0.0)) - 1.0)   # ELU(alpha=1)
    o = jnp.dot(h.astype(jnp.bfloat16), w2_ref[...],
                preferred_element_type=jnp.float32) + b2_ref[...]
    inv = jax.lax.rsqrt(jnp.maximum(jnp.sum(o * o, axis=1, keepdims=True), 1e-24))
    g_ref[0] = (o * (inv * scale)).astype(jnp.bfloat16)


def infonce_kernel(a1_ref, a2_ref, k1_ref, k2_ref, pos_ref, self1_ref, self2_ref,
                   out_ref, acc1_ref, acc2_ref):
    # Fused symmetric InfoNCE: online accumulation of exp(sim/tau) row sums for both
    # loss directions; the [N, N] exp matrices are never materialized.  Similarity
    # tiles are processed ONE AT A TIME (dot -> exp -> sublane row-sum -> accumulate
    # through the VMEM accumulator) so at most one [tk, ta] f32 tile is live.
    # Anchors sit on the lane axis (MXU output width = ta), output is lane-dense (1, N).
    j = pl.program_id(1)

    @pl.when(j == 0)
    def _():
        acc1_ref[...] = jnp.zeros_like(acc1_ref)
        acc2_ref[...] = jnp.zeros_like(acc2_ref)

    a1 = a1_ref[...]   # [ta, D]  z1 anchors (bf16, pre-scaled by sqrt(1/tau))
    a2 = a2_ref[...]   # [ta, D]  z2 anchors
    k1 = k1_ref[...]   # [tk, D]  z1 keys
    k2 = k2_ref[...]   # [tk, D]  z2 keys

    dn = (((1,), (1,)), ((), ()))   # contract the feature dim of both (no transpose)

    # direction 1 (anchors = z1): refl over z1 keys, then between over z2 keys
    s = jax.lax.dot_general(k1, a1, dn, preferred_element_type=jnp.float32)
    acc1_ref[...] += jnp.sum(jnp.exp(s), axis=0, keepdims=True)
    s = jax.lax.dot_general(k2, a1, dn, preferred_element_type=jnp.float32)
    acc1_ref[...] += jnp.sum(jnp.exp(s), axis=0, keepdims=True)
    # direction 2 (anchors = z2)
    s = jax.lax.dot_general(k2, a2, dn, preferred_element_type=jnp.float32)
    acc2_ref[...] += jnp.sum(jnp.exp(s), axis=0, keepdims=True)
    s = jax.lax.dot_general(k1, a2, dn, preferred_element_type=jnp.float32)
    acc2_ref[...] += jnp.sum(jnp.exp(s), axis=0, keepdims=True)

    @pl.when(j == pl.num_programs(1) - 1)
    def _():
        # den = refl.sum + between.sum - refl.diag; self terms use the same bf16
        # projections as the accumulation, so no systematic bias is introduced.
        d1 = jnp.maximum(acc1_ref[...] - jnp.exp(self1_ref[...]), 1e-8)
        d2 = jnp.maximum(acc2_ref[...] - jnp.exp(self2_ref[...]), 1e-8)
        # -log(num/den) = log(den) - log(num);  log(num) == pos == g1_i . g2_i
        out_ref[...] = 0.5 * (jnp.log(d1) + jnp.log(d2)) - pos_ref[...]


# ------------------------------ JAX wrappers ------------------------------------

def encode_gcn(a_stacked, x_stacked, d_stacked, w_g_bf, b_g):
    """z = relu(A_hat @ (x @ W) + b) for V stacked views in one batched launch.

    a_stacked: (V, N, N) bf16 (A + I);  x_stacked: (V, N, F);  d_stacked: (V, N, 1) f32.
    Returns z: (V, N, H) bf16.
    """
    v, n, f = x_stacked.shape
    h = w_g_bf.shape[1]
    x_bf = x_stacked.astype(jnp.bfloat16)

    tmx = _sub_tile(n, 512)
    xw = pl.pallas_call(
        xw_kernel,
        grid=(v, n // tmx),
        in_specs=[pl.BlockSpec((1, tmx, f), lambda vi, i: (vi, i, 0)),
                  pl.BlockSpec((f, h), lambda vi, i: (0, 0)),
                  pl.BlockSpec((1, tmx, 1), lambda vi, i: (vi, i, 0))],
        out_specs=pl.BlockSpec((1, tmx, h), lambda vi, i: (vi, i, 0)),
        out_shape=jax.ShapeDtypeStruct((v, n, h), jnp.bfloat16),
        compiler_params=pltpu.CompilerParams(
            dimension_semantics=("parallel", "parallel"),
            vmem_limit_bytes=VMEM_LIMIT),
    )(x_bf, w_g_bf, d_stacked)

    # 512-class tiles on the dominant (A+I) stream (~512 KB bf16 blocks, ~85%+ of
    # HBM roofline vs ~30-60% at 128x256), double-buffered VMEM stays < 4 MiB.
    tm = _sub_tile(n, 512)
    tk = _lane_tile(n, 512)
    z = pl.pallas_call(
        gcn_mm_kernel,
        grid=(v, n // tm, n // tk),
        in_specs=[pl.BlockSpec((1, tm, tk), lambda vi, i, k: (vi, i, k)),
                  pl.BlockSpec((1, tk, h), lambda vi, i, k: (vi, k, 0)),
                  pl.BlockSpec((1, tm, 1), lambda vi, i, k: (vi, i, 0)),
                  pl.BlockSpec((1, h), lambda vi, i, k: (0, 0))],
        out_specs=pl.BlockSpec((1, tm, h), lambda vi, i, k: (vi, i, 0)),
        out_shape=jax.ShapeDtypeStruct((v, n, h), jnp.bfloat16),
        scratch_shapes=[pltpu.VMEM((tm, h), jnp.float32)],
        compiler_params=pltpu.CompilerParams(
            dimension_semantics=("parallel", "parallel", "arbitrary"),
            vmem_limit_bytes=VMEM_LIMIT),
    )(a_stacked, xw, d_stacked, b_g)
    return z


def project_normalize(z_stacked, w1_bf, b1, w2_bf, b2, tau):
    """Projection head + L2-normalize (+ fold sqrt(1/tau)) for V stacked views."""
    v, n, h = z_stacked.shape
    p = w1_bf.shape[1]
    tm = _sub_tile(n, 256)
    scale = math.sqrt(1.0 / tau)
    g = pl.pallas_call(
        partial(proj_norm_kernel, scale=scale),
        grid=(v, n // tm),
        in_specs=[pl.BlockSpec((1, tm, h), lambda vi, i: (vi, i, 0)),
                  pl.BlockSpec((h, p), lambda vi, i: (0, 0)),
                  pl.BlockSpec((1, p), lambda vi, i: (0, 0)),
                  pl.BlockSpec((p, h), lambda vi, i: (0, 0)),
                  pl.BlockSpec((1, h), lambda vi, i: (0, 0))],
        out_specs=pl.BlockSpec((1, tm, h), lambda vi, i: (vi, i, 0)),
        out_shape=jax.ShapeDtypeStruct((v, n, h), jnp.bfloat16),
        compiler_params=pltpu.CompilerParams(
            dimension_semantics=("parallel", "parallel"),
            vmem_limit_bytes=VMEM_LIMIT),
    )(z_stacked.astype(jnp.bfloat16), w1_bf, b1, w2_bf, b2)
    return g


def fused_infonce(g1, g2, pos_row, self1_row, self2_row):
    """Per-node symmetric InfoNCE loss, lane-dense (N,) f32.

    g1, g2: (N, D) bf16, L2-normalized * sqrt(1/tau).
    pos_row / self*_row: (1, N) f32 raw logits (exp applied in the kernel finalize).
    """
    n, d = g1.shape
    ta = _lane_tile(n, 256)            # anchor tile: fills the 256-wide MXU on v6e/v7x
    # Resident keys if both key matrices (double-buffered) fit in the budget,
    # otherwise stream 512-row key chunks.
    if 2 * 2 * n * d * g1.dtype.itemsize <= KEY_RESIDENT_BYTES:
        tk = n
    else:
        tk = _sub_tile(n, 512)
    out = pl.pallas_call(
        infonce_kernel,
        grid=(n // ta, n // tk),
        in_specs=[pl.BlockSpec((ta, d), lambda i, j: (i, 0)),   # z1 anchors
                  pl.BlockSpec((ta, d), lambda i, j: (i, 0)),   # z2 anchors
                  pl.BlockSpec((tk, d), lambda i, j: (j, 0)),   # z1 keys
                  pl.BlockSpec((tk, d), lambda i, j: (j, 0)),   # z2 keys
                  pl.BlockSpec((1, ta), lambda i, j: (0, i)),   # pos
                  pl.BlockSpec((1, ta), lambda i, j: (0, i)),   # self (dir 1)
                  pl.BlockSpec((1, ta), lambda i, j: (0, i))],  # self (dir 2)
        out_specs=pl.BlockSpec((1, ta), lambda i, j: (0, i)),   # lane-dense per-node loss
        out_shape=jax.ShapeDtypeStruct((1, n), jnp.float32),
        scratch_shapes=[pltpu.VMEM((1, ta), jnp.float32),
                        pltpu.VMEM((1, ta), jnp.float32)],
        compiler_params=pltpu.CompilerParams(
            dimension_semantics=("parallel", "arbitrary"),
            vmem_limit_bytes=VMEM_LIMIT),
    )(g1, g2, g1, g2, pos_row, self1_row, self2_row)
    return out[0]


# ------------------------------- GRACE model ------------------------------------

def xavier_uniform(key, shape):
    fan_out, fan_in = shape  # torch Linear weight layout [out, in]
    bound = math.sqrt(6.0 / (fan_in + fan_out))
    return jax.random.uniform(key, shape, jnp.float32, -bound, bound)


class GracePallas:
    def __init__(self, key, num_features, num_hidden, num_proj_hidden,
                 drop_edge_rate, drop_feature_rate, tau=0.5):
        self.tau = float(tau)
        self.drop_edge_rate = float(drop_edge_rate)
        self.drop_feature_rate = float(drop_feature_rate)
        k_g, k1, k2 = jax.random.split(key, 3)
        # GCN encoder weight [F, H] (transposed from torch [out, in]), bias [1, H]
        self.w_g = xavier_uniform(k_g, (num_hidden, num_features)).T
        self.w_g_bf = self.w_g.astype(jnp.bfloat16)
        self.b_g = jnp.zeros((1, num_hidden), jnp.float32)
        # projection head (torch layout -> transposed to [in, out])
        self.w1 = xavier_uniform(k1, (num_proj_hidden, num_hidden)).T
        self.w1_bf = self.w1.astype(jnp.bfloat16)
        self.b1 = jnp.zeros((1, num_proj_hidden), jnp.float32)
        self.w2 = xavier_uniform(k2, (num_hidden, num_proj_hidden)).T
        self.w2_bf = self.w2.astype(jnp.bfloat16)
        self.b2 = jnp.zeros((1, num_hidden), jnp.float32)

    # ---- glue: dense (A + I) in bf16 plus the D^{-1/2} vector (no f32 N^2 pass,
    # no separate normalized-adjacency copy; the scaling is folded into the kernels).
    # TODO(synk): for realistic sparse graphs replace the dense (A+I) @ XW with a
    # gather-based SpMM (PrefetchScalarGridSpec carrying CSR offsets in SMEM).
    @staticmethod
    def build_graph(edge_index, edge_keep, num_nodes):
        src, dst = edge_index[0], edge_index[1]
        a = jnp.zeros((num_nodes, num_nodes), jnp.bfloat16)
        a = a.at[src, dst].max(edge_keep.astype(jnp.bfloat16))
        a = jnp.maximum(a, a.T)                                    # undirected graph
        a = a + jnp.eye(num_nodes, dtype=jnp.bfloat16)             # self loops -> (A+I)
        deg = jnp.sum(a, axis=1, dtype=jnp.float32)                # exact (0/1 entries)
        d_inv_sqrt = jax.lax.rsqrt(jnp.maximum(deg, 1e-12))
        return a, d_inv_sqrt

    def forward(self, x, edge_index):
        # GRACE.forward: gnn(x, edge_index) -> node embeddings [N, H]
        n = x.shape[0]
        keep_all = jnp.ones((edge_index.shape[1],), jnp.bool_)
        a, d = self.build_graph(edge_index, keep_all, n)
        z = encode_gcn(a[None], x[None], d[None, :, None], self.w_g_bf, self.b_g)
        return z[0]

    def loss(self, z1, z2, mean=True):
        n = z1.shape[0]
        g = project_normalize(jnp.stack([z1, z2]), self.w1_bf, self.b1,
                              self.w2_bf, self.b2, self.tau)
        g1f = g[0].astype(jnp.float32)
        g2f = g[1].astype(jnp.float32)
        # positive and self logits computed once per row OUTSIDE the O(N^2) loop
        # (O(N*D) wrapper glue, fed lane-dense to the loss kernel).
        pos = jnp.sum(g1f * g2f, axis=1).reshape(1, n)
        self1 = jnp.sum(g1f * g1f, axis=1).reshape(1, n)
        self2 = jnp.sum(g2f * g2f, axis=1).reshape(1, n)
        per_node = fused_infonce(g[0], g[1], pos, self1, self2)
        return jnp.mean(per_node) if mean else jnp.sum(per_node)

    def create_augmented_views(self, key, x, edge_index):
        k_e1, k_f1, k_e2, k_f2 = jax.random.split(key, 4)
        num_edges = edge_index.shape[1]

        def drop_feat(k, xx):
            if self.drop_feature_rate <= 0.0:
                return xx
            mask = jax.random.uniform(k, (xx.shape[1],)) < self.drop_feature_rate
            return xx * (1.0 - mask.astype(xx.dtype))[None, :]

        keep1 = jax.random.uniform(k_e1, (num_edges,)) >= self.drop_edge_rate
        keep2 = jax.random.uniform(k_e2, (num_edges,)) >= self.drop_edge_rate
        return (drop_feat(k_f1, x), keep1), (drop_feat(k_f2, x), keep2)

    def compute_loss(self, key, x, edge_index):
        n = x.shape[0]
        (x1, keep1), (x2, keep2) = self.create_augmented_views(key, x, edge_index)
        a1, d1 = self.build_graph(edge_index, keep1, n)
        a2, d2 = self.build_graph(edge_index, keep2, n)
        z = encode_gcn(jnp.stack([a1, a2]), jnp.stack([x1, x2]),
                       jnp.stack([d1, d2])[:, :, None], self.w_g_bf, self.b_g)
        return self.loss(z[0], z[1])


# ------------------------------ pure-JAX references ------------------------------

def ref_encode(a_bf16, d_inv_sqrt, x, w_g, b_g):
    af = a_bf16.astype(jnp.float32)
    d = d_inv_sqrt[:, None]
    return jnp.maximum(d * (af @ (d * (x @ w_g))) + b_g, 0.0)


def ref_loss(z1, z2, w1, b1, w2, b2, tau):
    def proj(z):
        h = z @ w1 + b1
        h = jnp.where(h > 0.0, h, jnp.exp(jnp.minimum(h, 0.0)) - 1.0)
        return h @ w2 + b2

    def norm(z):
        return z / jnp.maximum(jnp.linalg.norm(z, axis=1, keepdims=True), 1e-12)

    h1, h2 = norm(proj(z1)), norm(proj(z2))
    f = lambda s: jnp.exp(s / tau)

    def semi(a, b):
        refl, btwn = f(a @ a.T), f(a @ b.T)
        num = jnp.diag(btwn)
        den = jnp.maximum(refl.sum(1) + btwn.sum(1) - jnp.diag(refl), 1e-8)
        return -jnp.log(num / den)

    return jnp.mean(0.5 * (semi(h1, h2) + semi(h2, h1)))


# ----------------------------------- main ----------------------------------------

if __name__ == "__main__":
    key = jax.random.PRNGKey(0)
    k_x, k_e, k_m, k_aug = jax.random.split(key, 4)

    # lane-friendly small sizes (last dims multiples of 128)
    num_nodes = 256
    num_features = 128
    num_hidden = 128
    num_proj_hidden = 128
    num_edges = 1024

    x = jax.random.normal(k_x, (num_nodes, num_features), jnp.float32)
    edge_index = jax.random.randint(k_e, (2, num_edges), 0, num_nodes, dtype=jnp.int32)

    model = GracePallas(k_m, num_features, num_hidden, num_proj_hidden,
                        drop_edge_rate=0.2, drop_feature_rate=0.2, tau=0.5)

    # ---- forward pass (get_embeddings: no augmentation, keep all edges) ----
    emb = model.forward(x, edge_index)
    emb = jax.block_until_ready(emb)
    assert emb.shape == (num_nodes, num_hidden)
    assert bool(jnp.all(jnp.isfinite(emb.astype(jnp.float32))))

    # reference check for the encoder (bf16 kernel path vs f32 math, same graph)
    keep_all = jnp.ones((num_edges,), jnp.bool_)
    a_all, d_all = GracePallas.build_graph(edge_index, keep_all, num_nodes)
    z_ref = ref_encode(a_all, d_all, x, model.w_g, model.b_g)
    assert float(jnp.max(jnp.abs(emb.astype(jnp.float32) - z_ref))) < 0.3

    # ---- full contrastive path: augment -> batched encode -> project -> InfoNCE ----
    (x1, keep1), (x2, keep2) = model.create_augmented_views(k_aug, x, edge_index)
    a1, d1 = GracePallas.build_graph(edge_index, keep1, num_nodes)
    a2, d2 = GracePallas.build_graph(edge_index, keep2, num_nodes)
    z = encode_gcn(jnp.stack([a1, a2]), jnp.stack([x1, x2]),
                   jnp.stack([d1, d2])[:, :, None], model.w_g_bf, model.b_g)
    loss = model.loss(z[0], z[1])
    loss = jax.block_until_ready(loss)
    assert loss.shape == () and bool(jnp.isfinite(loss))

    # reference check for the projection + symmetric InfoNCE path (same z input)
    loss_r = ref_loss(z[0].astype(jnp.float32), z[1].astype(jnp.float32),
                      model.w1, model.b1, model.w2, model.b2, model.tau)
    assert abs(float(loss) - float(loss_r)) < 0.1 * (abs(float(loss_r)) + 1.0)

    print("KERNEL_OK")
</pallas_src>

<mosaic_0001>
module attributes {stable_mosaic.version = 11 : i64} {
  func.func @xw_kernel(%arg0: i32, %arg1: i32, %arg2: memref<1x256x128xbf16, #tpu.memory_space<vmem>>, %arg3: memref<128x128xbf16, #tpu.memory_space<vmem>>, %arg4: memref<1x256x1xf32, #tpu.memory_space<vmem>>, %arg5: memref<1x256x128xbf16, #tpu.memory_space<vmem>>) attributes {dimension_semantics = [#tpu.dimension_semantics<parallel>, #tpu.dimension_semantics<parallel>], iteration_bounds = array<i64: 1, 1>, scalar_prefetch = 0 : i64, scratch_operands = 0 : i64, tpu.core_type = #tpu.core_type<tc>, window_params = [{transform_indices = @transform_0, window_bounds = array<i64: 1, 256, 128>}, {pipeline_mode = #tpu.pipeline_mode<synchronous>, transform_indices = @transform_1, window_bounds = array<i64: 128, 128>}, {transform_indices = @transform_2, window_bounds = array<i64: 1, 256, 1>}, {transform_indices = @transform_3, window_bounds = array<i64: 1, 256, 128>}]} {
    %c0 = arith.constant 0 : index
    %c0_0 = arith.constant 0 : index
    %c0_1 = arith.constant 0 : index
    %0 = vector.load %arg2[%c0, %c0_0, %c0_1] : memref<1x256x128xbf16, #tpu.memory_space<vmem>>, vector<1x256x128xbf16>
    %1 = vector.shape_cast %0 : vector<1x256x128xbf16> to vector<256x128xbf16>
    %c0_2 = arith.constant 0 : index
    %c0_3 = arith.constant 0 : index
    %2 = vector.load %arg3[%c0_2, %c0_3] : memref<128x128xbf16, #tpu.memory_space<vmem>>, vector<128x128xbf16>
    %cst = arith.constant dense<0.000000e+00> : vector<256x128xf32>
    %3 = tpu.matmul %1, %2, %cst {dimension_numbers = #tpu.dot_dimension_numbers<[1], [0], [0], [1], [0, 0, 1, 1], [], []>} : vector<256x128xbf16>, vector<128x128xbf16>, vector<256x128xf32> -> vector<256x128xf32>
    %c0_4 = arith.constant 0 : index
    %c0_5 = arith.constant 0 : index
    %c0_6 = arith.constant 0 : index
    %4 = vector.load %arg4[%c0_4, %c0_5, %c0_6] : memref<1x256x1xf32, #tpu.memory_space<vmem>>, vector<1x256x1xf32>
    %5 = vector.shape_cast %4 : vector<1x256x1xf32> to vector<256x1xf32>
    %6 = vector.broadcast %5 : vector<256x1xf32> to vector<256x128xf32>
    %7 = arith.mulf %3, %6 : vector<256x128xf32>
    %8 = arith.truncf %7 : vector<256x128xf32> to vector<256x128xbf16>
    %c0_7 = arith.constant 0 : index
    %c0_8 = arith.constant 0 : index
    %c0_9 = arith.constant 0 : index
    %9 = vector.load %arg5[%c0_7, %c0_8, %c0_9] : memref<1x256x128xbf16, #tpu.memory_space<vmem>>, vector<1x256x128xbf16>
    %10 = vector.shape_cast %9 : vector<1x256x128xbf16> to vector<256x128xbf16>
    %11 = vector.shape_cast %8 : vector<256x128xbf16> to vector<1x256x128xbf16>
    tpu.vector_store %arg5[%c0_7, %c0_8, %c0_9], %11 {strides = array<i32>} : memref<1x256x128xbf16, #tpu.memory_space<vmem>>, vector<1x256x128xbf16>,
    return
  }
  func.func @transform_0(%arg0: i32, %arg1: i32) -> (i32, i32, i32) {
    %c0_i32 = arith.constant 0 : i32
    %c0_i32_0 = arith.constant 0 : i32
    return %arg0, %arg1, %c0_i32 : i32, i32, i32
  }
  func.func @transform_1(%arg0: i32, %arg1: i32) -> (i32, i32) {
    %c0_i32 = arith.constant 0 : i32
    %c0_i32_0 = arith.constant 0 : i32
    %c0_i32_1 = arith.constant 0 : i32
    return %c0_i32, %c0_i32_0 : i32, i32
  }
  func.func @transform_2(%arg0: i32, %arg1: i32) -> (i32, i32, i32) {
    %c0_i32 = arith.constant 0 : i32
    %c0_i32_0 = arith.constant 0 : i32
    return %arg0, %arg1, %c0_i32 : i32, i32, i32
  }
  func.func @transform_3(%arg0: i32, %arg1: i32) -> (i32, i32, i32) {
    %c0_i32 = arith.constant 0 : i32
    %c0_i32_0 = arith.constant 0 : i32
    return %arg0, %arg1, %c0_i32 : i32, i32, i32
  }
}

</mosaic_0001>

<llo_original>
// kernel: tpu_custom_call.1
$region0: #{tpu_custom_call.1}
  #allocation0 [shape = 'u32[]', space=smem, size = 0x4, offset = 0x4, fixed_abs, tag = 'smem constant byte address 0x4 - core index']
  #allocation1 [shape = 'u32[72,128]{1,0:T(1,128)}', space=vmem, size = 0x9000, scoped, tag = 'internal scratch']
  %s0 = inlined_call_operand.vmem [shape: bf16[1,256,128], index: 0, kind: input, shape index: {}]
  %s1 = inlined_call_operand.vmem [shape: bf16[128,128], index: 1, kind: input, shape index: {}]
  %s2 = inlined_call_operand.vmem [shape: f32[1,256,1], index: 2, kind: input, shape index: {}]
  %s3 = inlined_call_operand.hbm [shape: bf16[1,256,128], index: 3, kind: output, shape index: {}]
  %s4 = sld [smem:[#allocation0]]
  $region22: #{tpu_custom_call.1} parent=0
    _
  %s6 = ssub.s32 1, %s4
  %s7 = scalar_select 0, %s6, %s4
  $region1: #{tpu_custom_call.1} parent=0
    #allocation2 [shape = 'u8[65536]{0}', space=vmem, size = 0x10000, scoped, tag = 'output window, operand 0, single buffered']
    #allocation3 [shape = 's32[1]{0}', space=sflag, size = 0x4, scoped, tag = 'scoped memory for tpu_custom_call.1']
    %8 = vsyncpa [#allocation3], 0
    // Predicated region
    $region2: #{tpu_custom_call.1} parent=1 // pred_check
      _
    $region3: #{tpu_custom_call.1} parent=1 // pred_check_branch
      %10 = sbr.rel (0) target = $region5
    $region4: #{tpu_custom_call.1} parent=1 // pred_region
      _
    $region5: #{tpu_custom_call.1} parent=1 // pred_fallthru
      _
    // Predicated region
    $region6: #{tpu_custom_call.1} parent=1 // pred_check
      _
    $region7: #{tpu_custom_call.1} parent=1 // pred_check_branch
      %12 = sbr.rel (0) target = $region9
    $region8: #{tpu_custom_call.1} parent=1 // pred_region
      _
    $region9: #{tpu_custom_call.1} parent=1 // pred_fallthru
      _
    // Predicated region
    $region10: #{tpu_custom_call.1} parent=1 // pred_check
      _
    $region11: #{tpu_custom_call.1} parent=1 // pred_check_branch
      %14 = sbr.rel (0) target = $region13
    $region12: #{tpu_custom_call.1} parent=1 // pred_region
      _
    $region13: #{tpu_custom_call.1} parent=1 // pred_fallthru
      _
    %v15 = vld [vmem:[%s0] sm:$0xf]
    %v16 = vld [vmem:[%s0 + $0x4] sm:$0xf]
    %v17 = vld [vmem:[%s0 + $0x8] sm:$0xf]
    %v18 = vld [vmem:[%s0 + $0xc] sm:$0xf]
    %v19 = vld [vmem:[%s0 + $0x10] sm:$0xf]
    %v20 = vld [vmem:[%s0 + $0x14] sm:$0xf]
    %v21 = vld [vmem:[%s0 + $0x18] sm:$0xf]
    %v22 = vld [vmem:[%s0 + $0x1c] sm:$0xf]
    %v23 = vld [vmem:[%s0 + $0x20] sm:$0xf]
    %v24 = vld [vmem:[%s0 + $0x24] sm:$0xf]
    %v25 = vld [vmem:[%s0 + $0x28] sm:$0xf]
    %v26 = vld [vmem:[%s0 + $0x2c] sm:$0xf]
    %v27 = vld [vmem:[%s0 + $0x30] sm:$0xf]
    %v28 = vld [vmem:[%s0 + $0x34] sm:$0xf]
    %v29 = vld [vmem:[%s0 + $0x38] sm:$0xf]
    %v30 = vld [vmem:[%s0 + $0x3c] sm:$0xf]
    %v31 = vld [vmem:[%s0 + $0x40] sm:$0xf]
    %v32 = vld [vmem:[%s0 + $0x44] sm:$0xf]
    %v33 = vld [vmem:[%s0 + $0x48] sm:$0xf]
    %v34 = vld [vmem:[%s0 + $0x4c] sm:$0xf]
    %v35 = vld [vmem:[%s0 + $0x50] sm:$0xf]
    %v36 = vld [vmem:[%s0 + $0x54] sm:$0xf]
    %v37 = vld [vmem:[%s0 + $0x58] sm:$0xf]
    %v38 = vld [vmem:[%s0 + $0x5c] sm:$0xf]
    %v39 = vld [vmem:[%s0 + $0x60] sm:$0xf]
    %v40 = vld [vmem:[%s0 + $0x64] sm:$0xf]
    %v41 = vld [vmem:[%s0 + $0x68] sm:$0xf]
    %v42 = vld [vmem:[%s0 + $0x6c] sm:$0xf]
    %v43 = vld [vmem:[%s0 + $0x70] sm:$0xf]
    %v44 = vld [vmem:[%s0 + $0x74] sm:$0xf]
    %v45 = vld [vmem:[%s0 + $0x78] sm:$0xf]
    %v46 = vld [vmem:[%s0 + $0x7c] sm:$0xf]
    %v47 = vld [vmem:[%s1] sm:$0xf]
    %v48 = vld [vmem:[%s1 + $0x4] sm:$0xf]
    %v49 = vld [vmem:[%s1 + $0x8] sm:$0xf]
    %v50 = vld [vmem:[%s1 + $0xc] sm:$0xf]
    %v51 = vld [vmem:[%s1 + $0x10] sm:$0xf]
    %v52 = vld [vmem:[%s1 + $0x14] sm:$0xf]
    %v53 = vld [vmem:[%s1 + $0x18] sm:$0xf]
    %v54 = vld [vmem:[%s1 + $0x1c] sm:$0xf]
    %v55 = vld [vmem:[%s1 + $0x20] sm:$0xf]
    %v56 = vld [vmem:[%s1 + $0x24] sm:$0xf]
    %v57 = vld [vmem:[%s1 + $0x28] sm:$0xf]
    %v58 = vld [vmem:[%s1 + $0x2c] sm:$0xf]
    %v59 = vld [vmem:[%s1 + $0x30] sm:$0xf]
    %v60 = vld [vmem:[%s1 + $0x34] sm:$0xf]
    %v61 = vld [vmem:[%s1 + $0x38] sm:$0xf]
    %v62 = vld [vmem:[%s1 + $0x3c] sm:$0xf]
    %v95 = vunpack.c.l.b16 %v15
    %v96 = vunpack.c.l.b16 %v16
    %v97 = vunpack.c.l.b16 %v17
    %v98 = vunpack.c.l.b16 %v18
    %v99 = vunpack.c.l.b16 %v19
    %v100 = vunpack.c.l.b16 %v20
    %v101 = vunpack.c.l.b16 %v21
    %v102 = vunpack.c.l.b16 %v22
    %v103 = vunpack.c.l.b16 %v23
    %v104 = vunpack.c.l.b16 %v24
    %v105 = vunpack.c.l.b16 %v25
    %v106 = vunpack.c.l.b16 %v26
    %v107 = vunpack.c.l.b16 %v27
    %v108 = vunpack.c.l.b16 %v28
    %v109 = vunpack.c.l.b16 %v29
    %v110 = vunpack.c.l.b16 %v30
    %v111 = vunpack.c.l.b16 %v31
    %v112 = vunpack.c.l.b16 %v32
    %v113 = vunpack.c.l.b16 %v33
    %v114 = vunpack.c.l.b16 %v34
    %v115 = vunpack.c.l.b16 %v35
    %v116 = vunpack.c.l.b16 %v36
    %v117 = vunpack.c.l.b16 %v37
    %v118 = vunpack.c.l.b16 %v38
    %v119 = vunpack.c.l.b16 %v39
    %v120 = vunpack.c.l.b16 %v40
    %v121 = vunpack.c.l.b16 %v41
    %v122 = vunpack.c.l.b16 %v42
    %v123 = vunpack.c.l.b16 %v43
    %v124 = vunpack.c.l.b16 %v44
    %v125 = vunpack.c.l.b16 %v45
    %v126 = vunpack.c.l.b16 %v46
    %v127 = vpack.c.b16 %v96, %v95
    %v128 = vpack.c.b16 %v98, %v97
    %v129 = vpack.c.b16 %v100, %v99
    %v130 = vpack.c.b16 %v102, %v101
    %v131 = vpack.c.b16 %v104, %v103
    %v132 = vpack.c.b16 %v106, %v105
    %v133 = vpack.c.b16 %v108, %v107
    %v134 = vpack.c.b16 %v110, %v109
    %v135 = vpack.c.b16 %v112, %v111
    %v136 = vpack.c.b16 %v114, %v113
    %v137 = vpack.c.b16 %v116, %v115
    %v138 = vpack.c.b16 %v118, %v117
    %v139 = vpack.c.b16 %v120, %v119
    %v140 = vpack.c.b16 %v122, %v121
    %v141 = vpack.c.b16 %v124, %v123
    %v142 = vpack.c.b16 %v126, %v125
    %v175 = vunpack.c.l.b16 %v47
    %v176 = vunpack.c.l.b16 %v48
    %v177 = vunpack.c.l.b16 %v49
    %v178 = vunpack.c.l.b16 %v50
    %v179 = vunpack.c.l.b16 %v51
    %v180 = vunpack.c.l.b16 %v52
    %v181 = vunpack.c.l.b16 %v53
    %v182 = vunpack.c.l.b16 %v54
    %v183 = vunpack.c.l.b16 %v55
    %v184 = vunpack.c.l.b16 %v56
    %v185 = vunpack.c.l.b16 %v57
    %v186 = vunpack.c.l.b16 %v58
    %v187 = vunpack.c.l.b16 %v59
    %v188 = vunpack.c.l.b16 %v60
    %v189 = vunpack.c.l.b16 %v61
    %v190 = vunpack.c.l.b16 %v62
    %v191 = vpack.c.b16 %v176, %v175
    %v192 = vpack.c.b16 %v178, %v177
    %v193 = vpack.c.b16 %v180, %v179
    %v194 = vpack.c.b16 %v182, %v181
    %v195 = vpack.c.b16 %v184, %v183
    %v196 = vpack.c.b16 %v186, %v185
    %v197 = vpack.c.b16 %v188, %v187
    %v198 = vpack.c.b16 %v190, %v189
    %207 = vmatpush.bf16.msra.mxu0 %v198
    %208 = vmatpush.bf16.msra.mxu0 %v197
    %209 = vmatpush.bf16.msra.mxu0 %v196
    %210 = vmatpush.bf16.msra.mxu0 %v195
    %211 = vmatpush.bf16.msra.mxu0 %v194
    %212 = vmatpush.bf16.msra.mxu0 %v193
    %213 = vmatpush.bf16.msra.mxu0 %v192
    %214 = vmatpush.bf16.msra.mxu0 %v191
    %215 = vmatmul.bf16.gmra.mxu0 %v127
    %v216 = vpop.f32.mrf.mxu0
    %v217 = vadd.f32 0.0, %v216
    %v218 = vpop.f32.mrf.mxu0
    %v219 = vadd.f32 0.0, %v218
    %220 = vmatmul.bf16.gmra.mxu0 %v128
    %v221 = vpop.f32.mrf.mxu0
    %v222 = vadd.f32 0.0, %v221
    %v223 = vpop.f32.mrf.mxu0
    %v224 = vadd.f32 0.0, %v223
    %225 = vmatmul.bf16.gmra.mxu0 %v129
    %v226 = vpop.f32.mrf.mxu0
    %v227 = vadd.f32 0.0, %v226
    %v228 = vpop.f32.mrf.mxu0
    %v229 = vadd.f32 0.0, %v228
    %230 = vmatmul.bf16.gmra.mxu0 %v130
    %v231 = vpop.f32.mrf.mxu0
    %v232 = vadd.f32 0.0, %v231
    %v233 = vpop.f32.mrf.mxu0
    %v234 = vadd.f32 0.0, %v233
    %235 = vmatmul.bf16.gmra.mxu0 %v131
    %v236 = vpop.f32.mrf.mxu0
    %v237 = vadd.f32 0.0, %v236
    %v238 = vpop.f32.mrf.mxu0
    %v239 = vadd.f32 0.0, %v238
    %240 = vmatmul.bf16.gmra.mxu0 %v132
    %v241 = vpop.f32.mrf.mxu0
    %v242 = vadd.f32 0.0, %v241
    %v243 = vpop.f32.mrf.mxu0
    %v244 = vadd.f32 0.0, %v243
    %245 = vmatmul.bf16.gmra.mxu0 %v133
    %v246 = vpop.f32.mrf.mxu0
    %v247 = vadd.f32 0.0, %v246
    %v248 = vpop.f32.mrf.mxu0
    %v249 = vadd.f32 0.0, %v248
    %250 = vmatmul.bf16.gmra.mxu0 %v134
    %v251 = vpop.f32.mrf.mxu0
    %v252 = vadd.f32 0.0, %v251
    %v253 = vpop.f32.mrf.mxu0
    %v254 = vadd.f32 0.0, %v253
    %255 = vmatmul.bf16.gmra.mxu0 %v135
    %v256 = vpop.f32.mrf.mxu0
    %v257 = vadd.f32 0.0, %v256
    %v258 = vpop.f32.mrf.mxu0
    %v259 = vadd.f32 0.0, %v258
    %260 = vmatmul.bf16.gmra.mxu0 %v136
    %v261 = vpop.f32.mrf.mxu0
    %v262 = vadd.f32 0.0, %v261
    %v263 = vpop.f32.mrf.mxu0
    %v264 = vadd.f32 0.0, %v263
    %265 = vmatmul.bf16.gmra.mxu0 %v137
    %v266 = vpop.f32.mrf.mxu0
    %v267 = vadd.f32 0.0, %v266
    %v268 = vpop.f32.mrf.mxu0
    %v269 = vadd.f32 0.0, %v268
    %270 = vmatmul.bf16.gmra.mxu0 %v138
    %v271 = vpop.f32.mrf.mxu0
    %v272 = vadd.f32 0.0, %v271
    %v273 = vpop.f32.mrf.mxu0
    %v274 = vadd.f32 0.0, %v273
    %275 = vmatmul.bf16.gmra.mxu0 %v139
    %v276 = vpop.f32.mrf.mxu0
    %v277 = vadd.f32 0.0, %v276
    %v278 = vpop.f32.mrf.mxu0
    %v279 = vadd.f32 0.0, %v278
    %280 = vmatmul.bf16.gmra.mxu0 %v140
    %v281 = vpop.f32.mrf.mxu0
    %v282 = vadd.f32 0.0, %v281
    %v283 = vpop.f32.mrf.mxu0
    %v284 = vadd.f32 0.0, %v283
    %285 = vmatmul.bf16.gmra.mxu0 %v141
    %v286 = vpop.f32.mrf.mxu0
    %v287 = vadd.f32 0.0, %v286
    %v288 = vpop.f32.mrf.mxu0
    %v289 = vadd.f32 0.0, %v288
    %290 = vmatmul.bf16.gmra.mxu0 %v142
    %v291 = vpop.f32.mrf.mxu0
    %v292 = vadd.f32 0.0, %v291
    %v293 = vpop.f32.mrf.mxu0
    %v294 = vadd.f32 0.0, %v293
    %295 = vdwg.mxu0
    %v296 = vld [vmem:[%s2] sm:$0xff]
    %v297 = vld [vmem:[%s2 + $0x8] sm:$0xff]
    %v298 = vld [vmem:[%s2 + $0x10] sm:$0xff]
    %v299 = vld [vmem:[%s2 + $0x18] sm:$0xff]
    %v300 = vld [vmem:[%s2 + $0x20] sm:$0xff]
    %v301 = vld [vmem:[%s2 + $0x28] sm:$0xff]
    %v302 = vld [vmem:[%s2 + $0x30] sm:$0xff]
    %v303 = vld [vmem:[%s2 + $0x38] sm:$0xff]
    %v304 = vld [vmem:[%s2 + $0x40] sm:$0xff]
    %v305 = vld [vmem:[%s2 + $0x48] sm:$0xff]
    %v306 = vld [vmem:[%s2 + $0x50] sm:$0xff]
    %v307 = vld [vmem:[%s2 + $0x58] sm:$0xff]
    %v308 = vld [vmem:[%s2 + $0x60] sm:$0xff]
    %v309 = vld [vmem:[%s2 + $0x68] sm:$0xff]
    %v310 = vld [vmem:[%s2 + $0x70] sm:$0xff]
    %v311 = vld [vmem:[%s2 + $0x78] sm:$0xff]
    %v312 = vld [vmem:[%s2 + $0x80] sm:$0xff]
    %v313 = vld [vmem:[%s2 + $0x88] sm:$0xff]
    %v314 = vld [vmem:[%s2 + $0x90] sm:$0xff]
    %v315 = vld [vmem:[%s2 + $0x98] sm:$0xff]
    %v316 = vld [vmem:[%s2 + $0xa0] sm:$0xff]
    %v317 = vld [vmem:[%s2 + $0xa8] sm:$0xff]
    %v318 = vld [vmem:[%s2 + $0xb0] sm:$0xff]
    %v319 = vld [vmem:[%s2 + $0xb8] sm:$0xff]
    %v320 = vld [vmem:[%s2 + $0xc0] sm:$0xff]
    %v321 = vld [vmem:[%s2 + $0xc8] sm:$0xff]
    %v322 = vld [vmem:[%s2 + $0xd0] sm:$0xff]
    %v323 = vld [vmem:[%s2 + $0xd8] sm:$0xff]
    %v324 = vld [vmem:[%s2 + $0xe0] sm:$0xff]
    %v325 = vld [vmem:[%s2 + $0xe8] sm:$0xff]
    %v326 = vld [vmem:[%s2 + $0xf0] sm:$0xff]
    %v327 = vld [vmem:[%s2 + $0xf8] sm:$0xff]
    %329 = vset.pattern.permute.xlu0 0
    %330 = vperm.xlu0 %329, %v296
    %v331 = vpop.permute.xlu0 %330
    %334 = vset.pattern.permute.xlu0 0
    %335 = vperm.xlu0 %334, %v297
    %v336 = vpop.permute.xlu0 %335
    %339 = vset.pattern.permute.xlu0 0
    %340 = vperm.xlu0 %339, %v298
    %v341 = vpop.permute.xlu0 %340
    %344 = vset.pattern.permute.xlu0 0
    %345 = vperm.xlu0 %344, %v299
    %v346 = vpop.permute.xlu0 %345
    %349 = vset.pattern.permute.xlu0 0
    %350 = vperm.xlu0 %349, %v300
    %v351 = vpop.permute.xlu0 %350
    %354 = vset.pattern.permute.xlu0 0
    %355 = vperm.xlu0 %354, %v301
    %v356 = vpop.permute.xlu0 %355
    %359 = vset.pattern.permute.xlu0 0
    %360 = vperm.xlu0 %359, %v302
    %v361 = vpop.permute.xlu0 %360
    %364 = vset.pattern.permute.xlu0 0
    %365 = vperm.xlu0 %364, %v303
    %v366 = vpop.permute.xlu0 %365
    %369 = vset.pattern.permute.xlu0 0
    %370 = vperm.xlu0 %369, %v304
    %v371 = vpop.permute.xlu0 %370
    %374 = vset.pattern.permute.xlu0 0
    %375 = vperm.xlu0 %374, %v305
    %v376 = vpop.permute.xlu0 %375
    %379 = vset.pattern.permute.xlu0 0
    %380 = vperm.xlu0 %379, %v306
    %v381 = vpop.permute.xlu0 %380
    %384 = vset.pattern.permute.xlu0 0
    %385 = vperm.xlu0 %384, %v307
    %v386 = vpop.permute.xlu0 %385
    %389 = vset.pattern.permute.xlu0 0
    %390 = vperm.xlu0 %389, %v308
    %v391 = vpop.permute.xlu0 %390
    %394 = vset.pattern.permute.xlu0 0
    %395 = vperm.xlu0 %394, %v309
    %v396 = vpop.permute.xlu0 %395
    %399 = vset.pattern.permute.xlu0 0
    %400 = vperm.xlu0 %399, %v310
    %v401 = vpop.permute.xlu0 %400
    %404 = vset.pattern.permute.xlu0 0
    %405 = vperm.xlu0 %404, %v311
    %v406 = vpop.permute.xlu0 %405
    %409 = vset.pattern.permute.xlu0 0
    %410 = vperm.xlu0 %409, %v312
    %v411 = vpop.permute.xlu0 %410
    %414 = vset.pattern.permute.xlu0 0
    %415 = vperm.xlu0 %414, %v313
    %v416 = vpop.permute.xlu0 %415
    %419 = vset.pattern.permute.xlu0 0
    %420 = vperm.xlu0 %419, %v314
    %v421 = vpop.permute.xlu0 %420
    %424 = vset.pattern.permute.xlu0 0
    %425 = vperm.xlu0 %424, %v315
    %v426 = vpop.permute.xlu0 %425
    %429 = vset.pattern.permute.xlu0 0
    %430 = vperm.xlu0 %429, %v316
    %v431 = vpop.permute.xlu0 %430
    %434 = vset.pattern.permute.xlu0 0
    %435 = vperm.xlu0 %434, %v317
    %v436 = vpop.permute.xlu0 %435
    %439 = vset.pattern.permute.xlu0 0
    %440 = vperm.xlu0 %439, %v318
    %v441 = vpop.permute.xlu0 %440
    %444 = vset.pattern.permute.xlu0 0
    %445 = vperm.xlu0 %444, %v319
    %v446 = vpop.permute.xlu0 %445
    %449 = vset.pattern.permute.xlu0 0
    %450 = vperm.xlu0 %449, %v320
    %v451 = vpop.permute.xlu0 %450
    %454 = vset.pattern.permute.xlu0 0
    %455 = vperm.xlu0 %454, %v321
    %v456 = vpop.permute.xlu0 %455
    %459 = vset.pattern.permute.xlu0 0
    %460 = vperm.xlu0 %459, %v322
    %v461 = vpop.permute.xlu0 %460
    %464 = vset.pattern.permute.xlu0 0
    %465 = vperm.xlu0 %464, %v323
    %v466 = vpop.permute.xlu0 %465
    %469 = vset.pattern.permute.xlu0 0
    %470 = vperm.xlu0 %469, %v324
    %v471 = vpop.permute.xlu0 %470
    %474 = vset.pattern.permute.xlu0 0
    %475 = vperm.xlu0 %474, %v325
    %v476 = vpop.permute.xlu0 %475
    %479 = vset.pattern.permute.xlu0 0
    %480 = vperm.xlu0 %479, %v326
    %v481 = vpop.permute.xlu0 %480
    %484 = vset.pattern.permute.xlu0 0
    %485 = vperm.xlu0 %484, %v327
    %v486 = vpop.permute.xlu0 %485
    %v488 = vmul.f32 %v217, %v331
    %v489 = vmul.f32 %v219, %v336
    %v490 = vmul.f32 %v222, %v341
    %v491 = vmul.f32 %v224, %v346
    %v492 = vmul.f32 %v227, %v351
    %v493 = vmul.f32 %v229, %v356
    %v494 = vmul.f32 %v232, %v361
    %v495 = vmul.f32 %v234, %v366
    %v496 = vmul.f32 %v237, %v371
    %v497 = vmul.f32 %v239, %v376
    %v498 = vmul.f32 %v242, %v381
    %v499 = vmul.f32 %v244, %v386
    %v500 = vmul.f32 %v247, %v391
    %v501 = vmul.f32 %v249, %v396
    %v502 = vmul.f32 %v252, %v401
    %v503 = vmul.f32 %v254, %v406
    %v504 = vmul.f32 %v257, %v411
    %v505 = vmul.f32 %v259, %v416
    %v506 = vmul.f32 %v262, %v421
    %v507 = vmul.f32 %v264, %v426
    %v508 = vmul.f32 %v267, %v431
    %v509 = vmul.f32 %v269, %v436
    %v510 = vmul.f32 %v272, %v441
    %v511 = vmul.f32 %v274, %v446
    %v512 = vmul.f32 %v277, %v451
    %v513 = vmul.f32 %v279, %v456
    %v514 = vmul.f32 %v282, %v461
    %v515 = vmul.f32 %v284, %v466
    %v516 = vmul.f32 %v287, %v471
    %v517 = vmul.f32 %v289, %v476
    %v518 = vmul.f32 %v292, %v481
    %v519 = vmul.f32 %v294, %v486
    %v520 = vpack.c.bf16 %v488, %v488
    %v521 = vpack.c.bf16 %v489, %v489
    %v522 = vpack.c.bf16 %v490, %v490
    %v523 = vpack.c.bf16 %v491, %v491
    %v524 = vpack.c.bf16 %v492, %v492
    %v525 = vpack.c.bf16 %v493, %v493
    %v526 = vpack.c.bf16 %v494, %v494
    %v527 = vpack.c.bf16 %v495, %v495
    %v528 = vpack.c.bf16 %v496, %v496
    %v529 = vpack.c.bf16 %v497, %v497
    %v530 = vpack.c.bf16 %v498, %v498
    %v531 = vpack.c.bf16 %v499, %v499
    %v532 = vpack.c.bf16 %v500, %v500
    %v533 = vpack.c.bf16 %v501, %v501
    %v534 = vpack.c.bf16 %v502, %v502
    %v535 = vpack.c.bf16 %v503, %v503
    %v536 = vpack.c.bf16 %v504, %v504
    %v537 = vpack.c.bf16 %v505, %v505
    %v538 = vpack.c.bf16 %v506, %v506
    %v539 = vpack.c.bf16 %v507, %v507
    %v540 = vpack.c.bf16 %v508, %v508
    %v541 = vpack.c.bf16 %v509, %v509
    %v542 = vpack.c.bf16 %v510, %v510
    %v543 = vpack.c.bf16 %v511, %v511
    %v544 = vpack.c.bf16 %v512, %v512
    %v545 = vpack.c.bf16 %v513, %v513
    %v546 = vpack.c.bf16 %v514, %v514
    %v547 = vpack.c.bf16 %v515, %v515
    %v548 = vpack.c.bf16 %v516, %v516
    %v549 = vpack.c.bf16 %v517, %v517
    %v550 = vpack.c.bf16 %v518, %v518
    %v551 = vpack.c.bf16 %v519, %v519
    %552 = vst [vmem:[#allocation2] sm:$0xf] %v520
    %553 = vst [vmem:[#allocation2 + $0x4] sm:$0xf] %v521
    %554 = vst [vmem:[#allocation2 + $0x8] sm:$0xf] %v522
    %555 = vst [vmem:[#allocation2 + $0xc] sm:$0xf] %v523
    %556 = vst [vmem:[#allocation2 + $0x10] sm:$0xf] %v524
    %557 = vst [vmem:[#allocation2 + $0x14] sm:$0xf] %v525
    %558 = vst [vmem:[#allocation2 + $0x18] sm:$0xf] %v526
    %559 = vst [vmem:[#allocation2 + $0x1c] sm:$0xf] %v527
    %560 = vst [vmem:[#allocation2 + $0x20] sm:$0xf] %v528
    %561 = vst [vmem:[#allocation2 + $0x24] sm:$0xf] %v529
    %562 = vst [vmem:[#allocation2 + $0x28] sm:$0xf] %v530
    %563 = vst [vmem:[#allocation2 + $0x2c] sm:$0xf] %v531
    %564 = vst [vmem:[#allocation2 + $0x30] sm:$0xf] %v532
    %565 = vst [vmem:[#allocation2 + $0x34] sm:$0xf] %v533
    %566 = vst [vmem:[#allocation2 + $0x38] sm:$0xf] %v534
    %567 = vst [vmem:[#allocation2 + $0x3c] sm:$0xf] %v535
    %568 = vst [vmem:[#allocation2 + $0x40] sm:$0xf] %v536
    %569 = vst [vmem:[#allocation2 + $0x44] sm:$0xf] %v537
    %570 = vst [vmem:[#allocation2 + $0x48] sm:$0xf] %v538
    %571 = vst [vmem:[#allocation2 + $0x4c] sm:$0xf] %v539
    %572 = vst [vmem:[#allocation2 + $0x50] sm:$0xf] %v540
    %573 = vst [vmem:[#allocation2 + $0x54] sm:$0xf] %v541
    %574 = vst [vmem:[#allocation2 + $0x58] sm:$0xf] %v542
    %575 = vst [vmem:[#allocation2 + $0x5c] sm:$0xf] %v543
    %576 = vst [vmem:[#allocation2 + $0x60] sm:$0xf] %v544
    %577 = vst [vmem:[#allocation2 + $0x64] sm:$0xf] %v545
    %578 = vst [vmem:[#allocation2 + $0x68] sm:$0xf] %v546
    %579 = vst [vmem:[#allocation2 + $0x6c] sm:$0xf] %v547
    %580 = vst [vmem:[#allocation2 + $0x70] sm:$0xf] %v548
    %581 = vst [vmem:[#allocation2 + $0x74] sm:$0xf] %v549
    %582 = vst [vmem:[#allocation2 + $0x78] sm:$0xf] %v550
    %583 = vst [vmem:[#allocation2 + $0x7c] sm:$0xf] %v551
    // Predicated region
    $region14: #{tpu_custom_call.1} parent=1 // pred_check
      _
    $region15: #{tpu_custom_call.1} parent=1 // pred_check_branch
      %585 = sbr.rel (0) target = $region17
    $region16: #{tpu_custom_call.1} parent=1 // pred_region
      %587 = vsyncadd [#allocation3], 0
      %s588 = sshll.u32 [#allocation2], 4
      %s589 = int_to_ptr.vmem [resolvable:$true] %s588
      %s590 = sshll.u32 %s3, 4
      %s591 = int_to_ptr.hbm [resolvable:$true] %s590
      %596 = dma.vmem_to_hbm [thread:$0]  %s589, 2048, %s591, [#allocation3], 64, 64, 4
    $region17: #{tpu_custom_call.1} parent=1 // pred_fallthru
      _
    // Predicated region
    $region18: #{tpu_custom_call.1} parent=1 // pred_check
      _
    $region19: #{tpu_custom_call.1} parent=1 // pred_check_branch
      %598 = sbr.rel (0) target = $region21
    $region20: #{tpu_custom_call.1} parent=1 // pred_region
      %600 = dma.done [#allocation3], 2048
    $region21: #{tpu_custom_call.1} parent=1 // pred_fallthru
      _
    %601 = vsyncpa [#allocation3], 1

</llo_original>
